<compile_context>
chip_gen: v6e
topology: v6e:2x2x1
jax: 0.10.0
libtpu: 0.0.40
codegen_flags: <defaults>
</compile_context>

<pallas_src>
import functools

import jax
import jax.numpy as jnp
from jax import lax
from jax.experimental import pallas as pl
from jax.experimental.pallas import tpu as pltpu


# ---------------------------------------------------------------------------
# Kernel
# ---------------------------------------------------------------------------
def _residual_kernel(x_ref, w0_ref, wc_ref, w2_ref, bias_ref, out_ref, *,
                     rows_per_image, negative_slope, fused_shortcut):
    """Fused 3x3 conv + bias + LeakyReLU + shortcut in the (rows, W*C) layout.

    x_ref:    (block_rows, W*Cin)  bf16, several images stacked along rows.
    w0/w2:    (W*Cin, W*Cout)      bf16 banded weights for the dy=0 / dy=2 taps.
    wc_ref:   dy=1 band; when `fused_shortcut`, the 1x1-conv weight is
              concatenated along N -> (W*Cin, 2*W*Cout) so a single MXU pass
              yields [center-tap | shortcut].
    bias_ref: (1, W*Cout) or (1, 2*W*Cout) f32, per-pixel tiled bias(es).
    out_ref:  (block_rows, W*Cout) bf16.
    """
    x = x_ref[...]                                        # stays bf16

    rows = x.shape[0]
    # Per-image boundary masks from a narrow (rows, 1) iota.
    rid = lax.broadcasted_iota(jnp.int32, (rows, 1), 0) % rows_per_image
    not_top = rid != 0
    not_bot = rid != rows_per_image - 1

    # Three accumulating MXU passes over the same bf16 lhs; f32 accumulation.
    dc = jnp.dot(x, wc_ref[...], preferred_element_type=jnp.float32)
    d0 = jnp.dot(x, w0_ref[...], preferred_element_type=jnp.float32)
    d2 = jnp.dot(x, w2_ref[...], preferred_element_type=jnp.float32)

    # dy=0 / dy=2 taps: shift the f32 results by one row (zero halo at every
    # image boundary), instead of shifting the packed-bf16 input.
    wco = d0.shape[1]
    zrow = jnp.zeros((1, wco), jnp.float32)
    up = jnp.concatenate([zrow, d0[:-1, :]], axis=0)      # up[r] = d0[r-1]
    dn = jnp.concatenate([d2[1:, :], zrow], axis=0)       # dn[r] = d2[r+1]
    up = jnp.where(not_top, up, 0.0)
    dn = jnp.where(not_bot, dn, 0.0)

    dc = dc + bias_ref[...]
    if fused_shortcut:
        conv = dc[:, :wco] + up + dn                      # 3x3 conv + b3
        shortcut = dc[:, wco:]                            # 1x1 conv + b1
    else:
        conv = dc + up + dn
        shortcut = x.astype(jnp.float32)                  # identity residual

    res = jnp.where(conv >= 0.0, conv, negative_slope * conv)   # LeakyReLU
    out_ref[...] = (res + shortcut).astype(out_ref.dtype)


# ---------------------------------------------------------------------------
# Wrapper-side helpers (plain JAX)
# ---------------------------------------------------------------------------
def _conv3x3_bands(w3_hwio, width):
    """(3,3,Cin,Cout) HWIO -> three (W*Cin, W*Cout) block-Toeplitz bands
    (one per dy tap) so the 3x3 conv over the flattened (rows, W*Cin) layout
    becomes three matmuls.  Zero padding along W is folded into each band."""
    _, _, cin, cout = w3_hwio.shape
    eye = jnp.eye(width, dtype=jnp.float32)
    bands = []
    for dy in range(3):
        m = jnp.zeros(((width + 2) * cin, width * cout), jnp.float32)
        for dx in range(3):
            block_diag = jnp.kron(eye, w3_hwio[dy, dx].astype(jnp.float32))
            m = m.at[dx * cin:dx * cin + width * cin, :].add(block_diag)
        bands.append(m[cin:(width + 1) * cin, :])   # drop W-halo rows => pad
    return bands


def _bilinear_resize_nhwc(x, out_h, out_w):
    """nn.Upsample(mode='bilinear', align_corners=False), no antialias.
    Dtype-preserving (runs in bf16 on the kernel path, f32 in the reference)."""
    _, in_h, in_w, _ = x.shape
    dt = x.dtype

    def coords(out_size, in_size):
        i = jnp.arange(out_size, dtype=jnp.float32)
        src = (i + 0.5) * (in_size / out_size) - 0.5
        src = jnp.clip(src, 0.0, in_size - 1)
        lo = jnp.floor(src).astype(jnp.int32)
        hi = jnp.minimum(lo + 1, in_size - 1)
        wgt = (src - lo.astype(jnp.float32)).astype(dt)
        return lo, hi, wgt

    lo_h, hi_h, wh = coords(out_h, in_h)
    lo_w, hi_w, ww = coords(out_w, in_w)
    one = jnp.asarray(1.0, dt)
    x = (x[:, lo_h] * (one - wh)[None, :, None, None]
         + x[:, hi_h] * wh[None, :, None, None])
    x = (x[:, :, lo_w] * (one - ww)[None, None, :, None]
         + x[:, :, hi_w] * ww[None, None, :, None])
    return x


def _pick_images_per_block(n_images, rows_per_image, per_image_bytes,
                           weight_bytes, vmem_budget):
    """Largest per-step image count whose block fits the VMEM budget
    (resident weights + double-buffered blocks + f32 temporaries), never
    silently exceeding it, with a bf16-friendly sublane multiple."""
    divisors = [d for d in range(1, n_images + 1) if n_images % d == 0]
    legal = [d for d in divisors
             if (d * rows_per_image) % 16 == 0 or d == n_images]
    if not legal:
        legal = [n_images]
    avail = max(vmem_budget - weight_bytes, per_image_bytes)
    fits = [d for d in legal if d * per_image_bytes <= avail]
    if not fits:
        return min(legal)       # smallest legal block; compiler may still spill
    best = max(fits)
    # If the largest block leaves a single grid step, prefer >=2 steps as long
    # as each block still feeds the MXU hundreds of rows (lets each v7x core
    # pipeline DMA; negligible extra per-step overhead on single-TC v5e/v6e).
    if n_images // best < 2:
        multi = [d for d in fits
                 if n_images // d >= 2 and d * rows_per_image >= 256]
        if multi:
            best = max(multi)
    return best


def init_residual_block_params(key, in_channels, out_channels):
    """Deterministic synthetic parameters (shapes match the PyTorch module)."""
    k3, kb3, k1, kb1 = jax.random.split(key, 4)
    params = {
        # conv3x3 weight stored HWIO: (3, 3, Cin, Cout)
        "w3": 0.1 * jax.random.normal(k3, (3, 3, in_channels, out_channels),
                                      jnp.float32),
        "b3": 0.1 * jax.random.normal(kb3, (out_channels,), jnp.float32),
    }
    if in_channels != out_channels:
        # conv1x1 weight stored IO: (Cin, Cout); omitted for identity shortcut.
        params["w1"] = 0.1 * jax.random.normal(k1, (in_channels, out_channels),
                                               jnp.float32)
        params["b1"] = 0.1 * jax.random.normal(kb1, (out_channels,), jnp.float32)
    return params


# ---------------------------------------------------------------------------
# Public forward
# ---------------------------------------------------------------------------
@functools.partial(jax.jit, static_argnames=("upsample", "downsample",
                                             "negative_slope",
                                             "images_per_block"))
def residual_block_forward(x_nchw, params, *, upsample=False, downsample=False,
                           negative_slope=0.2, images_per_block=None):
    w3, b3 = params["w3"], params["b3"]
    cin, cout = w3.shape[2], w3.shape[3]
    fused_shortcut = "w1" in params

    # NCHW -> NHWC in bf16 (halves the layout-transform traffic and the 4x
    # upsampled intermediate).  Optional upsample precedes both branches in
    # the reference module, so applying it once to the input is exact.
    x = jnp.transpose(x_nchw, (0, 2, 3, 1)).astype(jnp.bfloat16)
    if upsample:
        x = _bilinear_resize_nhwc(x, x.shape[1] * 2, x.shape[2] * 2)
    n, h, w, _ = x.shape
    wc_in, wc_out = w * cin, w * cout

    x_flat = x.reshape(n * h, wc_in)

    band0, band1, band2 = _conv3x3_bands(w3, w)
    b3_tiled = jnp.tile(b3.astype(jnp.float32), w)
    if fused_shortcut:
        w1 = params["w1"].astype(jnp.float32)
        w1b = jnp.kron(jnp.eye(w, dtype=jnp.float32), w1)     # (wc_in, wc_out)
        band_c = jnp.concatenate([band1, w1b], axis=1)        # (wc_in, 2*wc_out)
        bias = jnp.concatenate(
            [b3_tiled, jnp.tile(params["b1"].astype(jnp.float32), w)],
            axis=0).reshape(1, 2 * wc_out)
    else:
        band_c = band1
        bias = b3_tiled.reshape(1, wc_out)
    wc_c = band_c.shape[1]

    band0 = band0.astype(jnp.bfloat16)
    band_c = band_c.astype(jnp.bfloat16)
    band2 = band2.astype(jnp.bfloat16)

    # ---- VMEM-aware block sizing ------------------------------------------
    try:
        vmem_cap = int(pltpu.get_tpu_info().vmem_capacity_bytes)
    except Exception:
        vmem_cap = 64 * 1024 * 1024               # conservative (v7x physical)
    vmem_budget = int(vmem_cap * 0.7)

    weight_bytes = (band0.size + band_c.size + band2.size) * 2 + bias.size * 4
    # 2x double-buffered bf16 input block + 2x bf16 output block + f32 temps.
    per_image_bytes = h * (2 * wc_in * 2 + 2 * wc_out * 2 + 6 * wc_c * 4)

    if images_per_block is None:
        images_per_block = _pick_images_per_block(
            n, h, per_image_bytes, weight_bytes, vmem_budget)
    tb = int(images_per_block)
    assert n % tb == 0, "images_per_block must divide the batch"
    block_rows = tb * h
    grid = (n // tb,)

    needed = weight_bytes + tb * per_image_bytes + (8 << 20)
    vmem_limit = int(min(max(needed, 32 << 20), int(vmem_cap * 0.9)))

    kernel = functools.partial(_residual_kernel,
                               rows_per_image=h,
                               negative_slope=negative_slope,
                               fused_shortcut=fused_shortcut)

    out_flat = pl.pallas_call(
        kernel,
        out_shape=jax.ShapeDtypeStruct((n * h, wc_out), jnp.bfloat16),
        grid_spec=pltpu.PrefetchScalarGridSpec(
            num_scalar_prefetch=0,
            grid=grid,
            in_specs=[
                pl.BlockSpec((block_rows, wc_in), lambda i: (i, 0)),
                pl.BlockSpec((wc_in, wc_out), lambda i: (0, 0)),
                pl.BlockSpec((wc_in, wc_c), lambda i: (0, 0)),
                pl.BlockSpec((wc_in, wc_out), lambda i: (0, 0)),
                pl.BlockSpec((1, wc_c), lambda i: (0, 0)),
            ],
            out_specs=pl.BlockSpec((block_rows, wc_out), lambda i: (i, 0)),
        ),
        compiler_params=pltpu.CompilerParams(
            dimension_semantics=("parallel",),     # batch tiles -> 2 TCs on v7x
            vmem_limit_bytes=vmem_limit,
        ),
    )(x_flat, band0, band_c, band2, bias)

    out = out_flat.reshape(n, h, w, cout)
    if downsample:
        # downsample distributes over (residual + shortcut) by linearity.
        out = _bilinear_resize_nhwc(out, h // 2, w // 2)
    return jnp.transpose(out, (0, 3, 1, 2)).astype(jnp.float32)  # NHWC -> NCHW


# ---------------------------------------------------------------------------
# Pure-JAX reference (mirrors the PyTorch module structure, f32 / HIGHEST)
# ---------------------------------------------------------------------------
def _reference_forward(x_nchw, params, *, upsample=False, downsample=False,
                       negative_slope=0.2):
    def _resize(t_nchw, out_h, out_w):
        t = jnp.transpose(t_nchw, (0, 2, 3, 1))
        t = _bilinear_resize_nhwc(t, out_h, out_w)
        return jnp.transpose(t, (0, 3, 1, 2))

    x = x_nchw.astype(jnp.float32)
    _, _, h, w = x.shape

    r = _resize(x, 2 * h, 2 * w) if upsample else x
    r = lax.conv_general_dilated(r, params["w3"], (1, 1), "SAME",
                                 dimension_numbers=("NCHW", "HWIO", "NCHW"),
                                 precision=lax.Precision.HIGHEST)
    r = r + params["b3"][None, :, None, None]
    r = jnp.where(r >= 0.0, r, negative_slope * r)
    if downsample:
        r = _resize(r, r.shape[2] // 2, r.shape[3] // 2)

    s = _resize(x, 2 * h, 2 * w) if upsample else x
    if "w1" in params:
        s = lax.conv_general_dilated(s, params["w1"][None, None], (1, 1), "SAME",
                                     dimension_numbers=("NCHW", "HWIO", "NCHW"),
                                     precision=lax.Precision.HIGHEST)
        s = s + params["b1"][None, :, None, None]
    if downsample:
        s = _resize(s, s.shape[2] // 2, s.shape[3] // 2)
    return r + s


if __name__ == "__main__":
    key = jax.random.PRNGKey(0)
    kx1, kx2, kp1, kp2 = jax.random.split(key, 4)

    # Case 1: ResidualBlock(4, 8) — 1x1-conv shortcut fused into the MXU N dim.
    x1 = jax.random.normal(kx1, (2, 4, 16, 16), jnp.float32)
    p1 = init_residual_block_params(kp1, 4, 8)
    out1 = jax.block_until_ready(residual_block_forward(x1, p1))
    ref1 = _reference_forward(x1, p1)
    assert out1.shape == (2, 8, 16, 16)
    assert float(jnp.max(jnp.abs(out1 - ref1))) < 0.1, "case 1 mismatch"

    # Case 2: ResidualBlock(8, 8) — identity shortcut (no 1x1 matmul).
    x2 = jax.random.normal(kx2, (2, 8, 16, 16), jnp.float32)
    p2 = init_residual_block_params(kp2, 8, 8)
    out2 = jax.block_until_ready(residual_block_forward(x2, p2))
    ref2 = _reference_forward(x2, p2)
    assert out2.shape == (2, 8, 16, 16)
    assert float(jnp.max(jnp.abs(out2 - ref2))) < 0.1, "case 2 mismatch"

    # Case 3: ResidualBlock(4, 8, upsample=True, downsample=True).
    out3 = jax.block_until_ready(
        residual_block_forward(x1, p1, upsample=True, downsample=True))
    ref3 = _reference_forward(x1, p1, upsample=True, downsample=True)
    assert out3.shape == (2, 8, 16, 16)
    assert float(jnp.max(jnp.abs(out3 - ref3))) < 0.1, "case 3 mismatch"

    print("KERNEL_OK")
</pallas_src>

<mosaic_0001>
module attributes {stable_mosaic.version = 11 : i64} {
  func.func @_residual_kernel(%arg0: i32, %arg1: memref<32x64xbf16, #tpu.memory_space<vmem>>, %arg2: memref<64x128xbf16, #tpu.memory_space<vmem>>, %arg3: memref<64x256xbf16, #tpu.memory_space<vmem>>, %arg4: memref<64x128xbf16, #tpu.memory_space<vmem>>, %arg5: memref<1x256xf32, #tpu.memory_space<vmem>>, %arg6: memref<32x128xbf16, #tpu.memory_space<vmem>>) attributes {dimension_semantics = [#tpu.dimension_semantics<parallel>], iteration_bounds = array<i64: 1>, scalar_prefetch = 0 : i64, scratch_operands = 0 : i64, tpu.core_type = #tpu.core_type<tc>, window_params = [{transform_indices = @transform_0, window_bounds = array<i64: 32, 64>}, {pipeline_mode = #tpu.pipeline_mode<synchronous>, transform_indices = @transform_1, window_bounds = array<i64: 64, 128>}, {pipeline_mode = #tpu.pipeline_mode<synchronous>, transform_indices = @transform_2, window_bounds = array<i64: 64, 256>}, {pipeline_mode = #tpu.pipeline_mode<synchronous>, transform_indices = @transform_3, window_bounds = array<i64: 64, 128>}, {pipeline_mode = #tpu.pipeline_mode<synchronous>, transform_indices = @transform_4, window_bounds = array<i64: 1, 256>}, {transform_indices = @transform_5, window_bounds = array<i64: 32, 128>}]} {
    %c0 = arith.constant 0 : index
    %c0_0 = arith.constant 0 : index
    %0 = vector.load %arg1[%c0, %c0_0] : memref<32x64xbf16, #tpu.memory_space<vmem>>, vector<32x64xbf16>
    %1 = tpu.iota {dimensions = array<i32: 0>} : vector<32x1xi32>
    %c16_i32 = arith.constant 16 : i32
    %c0_i32 = arith.constant 0 : i32
    %2 = arith.cmpi eq, %c16_i32, %c0_i32 : i32
    %c1_i32 = arith.constant 1 : i32
    %3 = arith.select %2, %c1_i32, %c16_i32 : i32
    %4 = vector.broadcast %3 : i32 to vector<32x1xi32>
    %5 = arith.remsi %1, %4 : vector<32x1xi32>
    %c0_i32_1 = arith.constant 0 : i32
    %6 = vector.broadcast %c0_i32_1 : i32 to vector<32x1xi32>
    %7 = arith.cmpi ne, %5, %6 : vector<32x1xi32>
    %c0_i32_2 = arith.constant 0 : i32
    %8 = vector.broadcast %c0_i32_2 : i32 to vector<32x1xi32>
    %9 = arith.cmpi slt, %5, %8 : vector<32x1xi32>
    %c0_i32_3 = arith.constant 0 : i32
    %10 = arith.cmpi slt, %3, %c0_i32_3 : i32
    %11 = vector.broadcast %10 : i1 to vector<32x1xi1>
    %12 = vector.broadcast %11 : vector<32x1xi1> to vector<32x1xi1>
    %13 = arith.xori %9, %12 : vector<32x1xi1>
    %14 = arith.andi %13, %7 : vector<32x1xi1>
    %15 = vector.broadcast %3 : i32 to vector<32x1xi32>
    %16 = arith.addi %5, %15 : vector<32x1xi32>
    %17 = arith.select %14, %16, %5 : vector<32x1xi1>, vector<32x1xi32>
    %c0_i32_4 = arith.constant 0 : i32
    %18 = vector.broadcast %c0_i32_4 : i32 to vector<32x1xi32>
    %19 = arith.cmpi ne, %17, %18 : vector<32x1xi32>
    %c15_i32 = arith.constant 15 : i32
    %20 = vector.broadcast %c15_i32 : i32 to vector<32x1xi32>
    %21 = arith.cmpi ne, %17, %20 : vector<32x1xi32>
    %c0_5 = arith.constant 0 : index
    %c0_6 = arith.constant 0 : index
    %22 = vector.load %arg3[%c0_5, %c0_6] : memref<64x256xbf16, #tpu.memory_space<vmem>>, vector<64x256xbf16>
    %cst = arith.constant dense<0.000000e+00> : vector<32x256xf32>
    %23 = tpu.matmul %0, %22, %cst {dimension_numbers = #tpu.dot_dimension_numbers<[1], [0], [0], [1], [0, 0, 1, 1], [], []>} : vector<32x64xbf16>, vector<64x256xbf16>, vector<32x256xf32> -> vector<32x256xf32>
    %c0_7 = arith.constant 0 : index
    %c0_8 = arith.constant 0 : index
    %24 = vector.load %arg2[%c0_7, %c0_8] : memref<64x128xbf16, #tpu.memory_space<vmem>>, vector<64x128xbf16>
    %cst_9 = arith.constant dense<0.000000e+00> : vector<32x128xf32>
    %25 = tpu.matmul %0, %24, %cst_9 {dimension_numbers = #tpu.dot_dimension_numbers<[1], [0], [0], [1], [0, 0, 1, 1], [], []>} : vector<32x64xbf16>, vector<64x128xbf16>, vector<32x128xf32> -> vector<32x128xf32>
    %c0_10 = arith.constant 0 : index
    %c0_11 = arith.constant 0 : index
    %26 = vector.load %arg4[%c0_10, %c0_11] : memref<64x128xbf16, #tpu.memory_space<vmem>>, vector<64x128xbf16>
    %cst_12 = arith.constant dense<0.000000e+00> : vector<32x128xf32>
    %27 = tpu.matmul %0, %26, %cst_12 {dimension_numbers = #tpu.dot_dimension_numbers<[1], [0], [0], [1], [0, 0, 1, 1], [], []>} : vector<32x64xbf16>, vector<64x128xbf16>, vector<32x128xf32> -> vector<32x128xf32>
    %cst_13 = arith.constant 0.000000e+00 : f32
    %28 = vector.broadcast %cst_13 : f32 to vector<1x128xf32>
    %29 = vector.extract_strided_slice %25 {offsets = [0, 0], sizes = [31, 128], strides = [1, 1]} : vector<32x128xf32> to vector<31x128xf32>
    %30 = tpu.concatenate %28, %29 in 0 : vector<1x128xf32>, vector<31x128xf32> -> vector<32x128xf32>
    %31 = vector.extract_strided_slice %27 {offsets = [1, 0], sizes = [31, 128], strides = [1, 1]} : vector<32x128xf32> to vector<31x128xf32>
    %32 = tpu.concatenate %31, %28 in 0 : vector<31x128xf32>, vector<1x128xf32> -> vector<32x128xf32>
    %cst_14 = arith.constant 0.000000e+00 : f32
    %33 = vector.shape_cast %19 : vector<32x1xi1> to vector<32x1xi1>
    %34 = vector.broadcast %33 : vector<32x1xi1> to vector<32x128xi1>
    %35 = vector.broadcast %cst_14 : f32 to vector<32x128xf32>
    %36 = arith.select %34, %30, %35 : vector<32x128xi1>, vector<32x128xf32>
    %cst_15 = arith.constant 0.000000e+00 : f32
    %37 = vector.shape_cast %21 : vector<32x1xi1> to vector<32x1xi1>
    %38 = vector.broadcast %37 : vector<32x1xi1> to vector<32x128xi1>
    %39 = vector.broadcast %cst_15 : f32 to vector<32x128xf32>
    %40 = arith.select %38, %32, %39 : vector<32x128xi1>, vector<32x128xf32>
    %c0_16 = arith.constant 0 : index
    %c0_17 = arith.constant 0 : index
    %41 = vector.load %arg5[%c0_16, %c0_17] : memref<1x256xf32, #tpu.memory_space<vmem>>, vector<1x256xf32>
    %42 = vector.broadcast %41 : vector<1x256xf32> to vector<32x256xf32>
    %43 = arith.addf %23, %42 : vector<32x256xf32>
    %44 = vector.extract_strided_slice %43 {offsets = [0, 0], sizes = [32, 128], strides = [1, 1]} : vector<32x256xf32> to vector<32x128xf32>
    %45 = arith.addf %44, %36 : vector<32x128xf32>
    %46 = arith.addf %45, %40 : vector<32x128xf32>
    %47 = vector.extract_strided_slice %43 {offsets = [0, 128], sizes = [32, 128], strides = [1, 1]} : vector<32x256xf32> to vector<32x128xf32>
    %cst_18 = arith.constant 0.000000e+00 : f32
    %48 = vector.broadcast %cst_18 : f32 to vector<32x128xf32>
    %49 = arith.cmpf oge, %46, %48 : vector<32x128xf32>
    %cst_19 = arith.constant 2.000000e-01 : f32
    %50 = vector.broadcast %cst_19 : f32 to vector<32x128xf32>
    %51 = arith.mulf %50, %46 : vector<32x128xf32>
    %52 = arith.select %49, %46, %51 : vector<32x128xi1>, vector<32x128xf32>
    %53 = arith.addf %52, %47 : vector<32x128xf32>
    %54 = arith.truncf %53 : vector<32x128xf32> to vector<32x128xbf16>
    %c0_20 = arith.constant 0 : index
    %c0_21 = arith.constant 0 : index
    %55 = vector.load %arg6[%c0_20, %c0_21] : memref<32x128xbf16, #tpu.memory_space<vmem>>, vector<32x128xbf16>
    tpu.vector_store %arg6[%c0_20, %c0_21], %54 {strides = array<i32>} : memref<32x128xbf16, #tpu.memory_space<vmem>>, vector<32x128xbf16>,
    return
  }
  func.func @transform_0(%arg0: i32) -> (i32, i32) {
    %c0_i32 = arith.constant 0 : i32
    %c0_i32_0 = arith.constant 0 : i32
    return %arg0, %c0_i32 : i32, i32
  }
  func.func @transform_1(%arg0: i32) -> (i32, i32) {
    %c0_i32 = arith.constant 0 : i32
    %c0_i32_0 = arith.constant 0 : i32
    %c0_i32_1 = arith.constant 0 : i32
    return %c0_i32, %c0_i32_0 : i32, i32
  }
  func.func @transform_2(%arg0: i32) -> (i32, i32) {
    %c0_i32 = arith.constant 0 : i32
    %c0_i32_0 = arith.constant 0 : i32
    %c0_i32_1 = arith.constant 0 : i32
    return %c0_i32, %c0_i32_0 : i32, i32
  }
  func.func @transform_3(%arg0: i32) -> (i32, i32) {
    %c0_i32 = arith.constant 0 : i32
    %c0_i32_0 = arith.constant 0 : i32
    %c0_i32_1 = arith.constant 0 : i32
    return %c0_i32, %c0_i32_0 : i32, i32
  }
  func.func @transform_4(%arg0: i32) -> (i32, i32) {
    %c0_i32 = arith.constant 0 : i32
    %c0_i32_0 = arith.constant 0 : i32
    %c0_i32_1 = arith.constant 0 : i32
    return %c0_i32, %c0_i32_0 : i32, i32
  }
  func.func @transform_5(%arg0: i32) -> (i32, i32) {
    %c0_i32 = arith.constant 0 : i32
    %c0_i32_0 = arith.constant 0 : i32
    return %arg0, %c0_i32 : i32, i32
  }
}

</mosaic_0001>

<llo_original>
// kernel: tile.13
$region0: #{tile.13}
  #allocation0 [shape = 's32[1]{0}', space=sflag, size = 0x4, scoped, tag = 'scoped memory for tile.13']
  %s0 = inlined_call_operand.vmem [shape: f32[8], index: 0, kind: input, shape index: {}]
  %s1 = inlined_call_operand.vmem [shape: f32[16,8], index: 1, kind: output, shape index: {}]
  // Predicated region
  $region2: #{tile.13} parent=0 // pred_check
    _
  $region3: #{tile.13} parent=0 // pred_check_branch
    %3 = sbr.rel (0) target = $region5
  $region4: #{tile.13} parent=0 // pred_region
    _
  $region5: #{tile.13} parent=0 // pred_fallthru
    _
  %v4 = vld [vmem:[%s0] ss:$0 sm:$0xff]
  %5 = vst [vmem:[%s1] sm:$0xff] %v4
  %s6 = scalar_lea.vmem %s1, 8
  %7 = vst [vmem:[%s6] sm:$0xff] %v4

// kernel: tile.14
$region0: #{tile.14}
  %s0 = inlined_call_operand.vmem [shape: f32[16,8], index: 0, kind: input, shape index: {}]
  %s1 = inlined_call_operand.vmem [shape: f32[128], index: 1, kind: output, shape index: {}]
  $region1: #{tile.14} parent=0
    #allocation0 [shape = 'u8[4096]{0}', space=vmem, size = 0x1000, scoped, tag = 'scoped mem for output reshape']
    %v2 = vld [vmem:[%s0] sm:$0x1]
    %vm3 = vcmask 64512
    %4 = vst.msk [vmem:[#allocation0] sm:$0x1] %vm3, %v2
    %s5 = scalar_lea.vmem %s0, 15
    %v6 = vld [vmem:[%s5] sm:$0x1]
    %7 = vrot.lane.b32.xlu0 %v6, 120
    %v8 = vpop.permute.xlu0 %7
    %vm9 = vcmask 1048512
    %10 = vst.msk [vmem:[#allocation0] sm:$0x1] %vm9, %v8
    %s11 = scalar_lea.vmem %s0, 14
    %v12 = vld [vmem:[%s11] sm:$0x1]
    %13 = vrot.lane.b32.xlu0 %v12, 112
    %v14 = vpop.permute.xlu0 %13
    %vm15 = vcmask 982912
    %16 = vst.msk [vmem:[#allocation0] sm:$0x1] %vm15, %v14
    %s17 = scalar_lea.vmem %s0, 13
    %v18 = vld [vmem:[%s17] sm:$0x1]
    %19 = vrot.lane.b32.xlu0 %v18, 104
    %v20 = vpop.permute.xlu0 %19
    %vm21 = vcmask 917312
    %22 = vst.msk [vmem:[#allocation0] sm:$0x1] %vm21, %v20
    %s23 = scalar_lea.vmem %s0, 12
    %v24 = vld [vmem:[%s23] sm:$0x1]
    %25 = vrot.lane.b32.xlu0 %v24, 96
    %v26 = vpop.permute.xlu0 %25
    %vm27 = vcmask 851712
    %28 = vst.msk [vmem:[#allocation0] sm:$0x1] %vm27, %v26
    %s29 = scalar_lea.vmem %s0, 11
    %v30 = vld [vmem:[%s29] sm:$0x1]
    %31 = vrot.lane.b32.xlu0 %v30, 88
    %v32 = vpop.permute.xlu0 %31
    %vm33 = vcmask 786112
    %34 = vst.msk [vmem:[#allocation0] sm:$0x1] %vm33, %v32
    %s35 = scalar_lea.vmem %s0, 10
    %v36 = vld [vmem:[%s35] sm:$0x1]
    %37 = vrot.lane.b32.xlu0 %v36, 80
    %v38 = vpop.permute.xlu0 %37
    %vm39 = vcmask 720512
    %40 = vst.msk [vmem:[#allocation0] sm:$0x1] %vm39, %v38
    %s41 = scalar_lea.vmem %s0, 9
    %v42 = vld [vmem:[%s41] sm:$0x1]
    %43 = vrot.lane.b32.xlu0 %v42, 72
    %v44 = vpop.permute.xlu0 %43
    %vm45 = vcmask 654912
    %46 = vst.msk [vmem:[#allocation0] sm:$0x1] %vm45, %v44
    %s47 = scalar_lea.vmem %s0, 8
    %v48 = vld [vmem:[%s47] sm:$0x1]
    %49 = vrot.lane.b32.xlu0 %v48, 64
    %v50 = vpop.permute.xlu0 %49
    %vm51 = vcmask 589312
    %52 = vst.msk [vmem:[#allocation0] sm:$0x1] %vm51, %v50
    %s53 = scalar_lea.vmem %s0, 7
    %v54 = vld [vmem:[%s53] sm:$0x1]
    %55 = vrot.lane.b32.xlu0 %v54, 56
    %v56 = vpop.permute.xlu0 %55
    %vm57 = vcmask 523712
    %58 = vst.msk [vmem:[#allocation0] sm:$0x1] %vm57, %v56
    %s59 = scalar_lea.vmem %s0, 6
    %v60 = vld [vmem:[%s59] sm:$0x1]
    %61 = vrot.lane.b32.xlu0 %v60, 48
    %v62 = vpop.permute.xlu0 %61
    %vm63 = vcmask 458112
    %64 = vst.msk [vmem:[#allocation0] sm:$0x1] %vm63, %v62
    %s65 = scalar_lea.vmem %s0, 5
    %v66 = vld [vmem:[%s65] sm:$0x1]
    %67 = vrot.lane.b32.xlu0 %v66, 40
    %v68 = vpop.permute.xlu0 %67
    %vm69 = vcmask 392512
    %70 = vst.msk [vmem:[#allocation0] sm:$0x1] %vm69, %v68
    %s71 = scalar_lea.vmem %s0, 4
    %v72 = vld [vmem:[%s71] sm:$0x1]
    %73 = vrot.lane.b32.xlu0 %v72, 32
    %v74 = vpop.permute.xlu0 %73
    %vm75 = vcmask 326912
    %76 = vst.msk [vmem:[#allocation0] sm:$0x1] %vm75, %v74
    %s77 = scalar_lea.vmem %s0, 3
    %v78 = vld [vmem:[%s77] sm:$0x1]
    %79 = vrot.lane.b32.xlu0 %v78, 24
    %v80 = vpop.permute.xlu0 %79
    %vm81 = vcmask 261312
    %82 = vst.msk [vmem:[#allocation0] sm:$0x1] %vm81, %v80
    %s83 = scalar_lea.vmem %s0, 2
    %v84 = vld [vmem:[%s83] sm:$0x1]
    %85 = vrot.lane.b32.xlu0 %v84, 16
    %v86 = vpop.permute.xlu0 %85
    %vm87 = vcmask 195712
    %88 = vst.msk [vmem:[#allocation0] sm:$0x1] %vm87, %v86
    %s89 = scalar_lea.vmem %s0, 1
    %v90 = vld [vmem:[%s89] sm:$0x1]
    %91 = vrot.lane.b32.xlu0 %v90, 8
    %v92 = vpop.permute.xlu0 %91
    %vm93 = vcmask 130112
    %94 = vst.msk [vmem:[#allocation0] sm:$0x1] %vm93, %v92
    %s96 = sshll.u32 1, 1
    %s97 = ssub.s32 %s96, 1
    %v99 = vld [vmem:[#allocation0] sm:%s97]
    %s100 = sshll.u32 1, 1
    %s101 = ssub.s32 %s100, 1
    %102 = vst [vmem:[%s1] sm:%s101] %v99

// kernel: residual_block_forward.1
$region0: #{residual_block_forward.1}
  #allocation0 [shape = 'u32[]', space=smem, size = 0x4, offset = 0x4, fixed_abs, tag = 'smem constant byte address 0x4 - core index']
  #allocation1 [shape = 'u32[144,128]{1,0:T(1,128)}', space=vmem, size = 0x12000, scoped, tag = 'internal scratch']
  %s0 = inlined_call_operand.vmem [shape: bf16[32,64], index: 0, kind: input, shape index: {}]
  %s1 = inlined_call_operand.vmem [shape: bf16[64,128], index: 1, kind: input, shape index: {}]
  %s2 = inlined_call_operand.vmem [shape: bf16[64,256], index: 2, kind: input, shape index: {}]
  %s3 = inlined_call_operand.vmem [shape: bf16[64,128], index: 3, kind: input, shape index: {}]
  %s4 = inlined_call_operand.vmem [shape: f32[1,256], index: 4, kind: input, shape index: {}]
  %s5 = inlined_call_operand.vmem [shape: bf16[32,128], index: 5, kind: output, shape index: {}]
  %s6 = sld [smem:[#allocation0]]
  $region30: #{residual_block_forward.1} parent=0
    _
  %s8 = ssub.s32 1, %s6
  %s9 = scalar_select 0, %s8, %s6
  // Predicated region
  $region2: #{residual_block_forward.1} parent=0 // pred_check
    _
  $region3: #{residual_block_forward.1} parent=0 // pred_check_branch
    %11 = sbr.rel (0) target = $region5
  $region4: #{residual_block_forward.1} parent=0 // pred_region
    _
  $region5: #{residual_block_forward.1} parent=0 // pred_fallthru
    _
  // Predicated region
  $region6: #{residual_block_forward.1} parent=0 // pred_check
    _
  $region7: #{residual_block_forward.1} parent=0 // pred_check_branch
    %13 = sbr.rel (0) target = $region9
  $region8: #{residual_block_forward.1} parent=0 // pred_region
    _
  $region9: #{residual_block_forward.1} parent=0 // pred_fallthru
    _
  // Predicated region
  $region10: #{residual_block_forward.1} parent=0 // pred_check
    _
  $region11: #{residual_block_forward.1} parent=0 // pred_check_branch
    %15 = sbr.rel (0) target = $region13
  $region12: #{residual_block_forward.1} parent=0 // pred_region
    _
  $region13: #{residual_block_forward.1} parent=0 // pred_fallthru
    _
  // Predicated region
  $region14: #{residual_block_forward.1} parent=0 // pred_check
    _
  $region15: #{residual_block_forward.1} parent=0 // pred_check_branch
    %17 = sbr.rel (0) target = $region17
  $region16: #{residual_block_forward.1} parent=0 // pred_region
    _
  $region17: #{residual_block_forward.1} parent=0 // pred_fallthru
    _
  // Predicated region
  $region18: #{residual_block_forward.1} parent=0 // pred_check
    _
  $region19: #{residual_block_forward.1} parent=0 // pred_check_branch
    %19 = sbr.rel (0) target = $region21
  $region20: #{residual_block_forward.1} parent=0 // pred_region
    _
  $region21: #{residual_block_forward.1} parent=0 // pred_fallthru
    _
  %v21 = vld [vmem:[%s0] sm:$0xf]
  %v22 = vld [vmem:[%s0 + $0x4] sm:$0xf]
  %v23 = vld [vmem:[%s0 + $0x8] sm:$0xf]
  %v24 = vld [vmem:[%s0 + $0xc] sm:$0xf]
  %v25 = vlaneseq
  %v26 = vshrl.u32 %v25, 7
  %v27 = vadd.s32 %v26, 8
  %v28 = vadd.s32 %v26, 16
  %v29 = vadd.s32 %v26, 24
  %vm30 = vcmp.lt.s32.totalorder %v26, 0
  %v31 = vsub.s32 0, %v26
  %v32 = vsel %vm30, %v31, %v26
  %v33 = vshrl.u32 %v32, 4
  %v34 = vand.u32 %v32, 15
  %v35 = vsub.s32 0, %v34
  %v36 = vsel %vm30, %v35, %v34
  %vm37 = vcmp.lt.s32.totalorder %v27, 0
  %v38 = vsub.s32 0, %v27
  %v39 = vsel %vm37, %v38, %v27
  %v40 = vshrl.u32 %v39, 4
  %v41 = vand.u32 %v39, 15
  %v42 = vsub.s32 0, %v41
  %v43 = vsel %vm37, %v42, %v41
  %vm44 = vcmp.lt.s32.totalorder %v28, 0
  %v45 = vsub.s32 0, %v28
  %v46 = vsel %vm44, %v45, %v28
  %v47 = vshrl.u32 %v46, 4
  %v48 = vand.u32 %v46, 15
  %v49 = vsub.s32 0, %v48
  %v50 = vsel %vm44, %v49, %v48
  %vm51 = vcmp.lt.s32.totalorder %v29, 0
  %v52 = vsub.s32 0, %v29
  %v53 = vsel %vm51, %v52, %v29
  %v54 = vshrl.u32 %v53, 4
  %v55 = vand.u32 %v53, 15
  %v56 = vsub.s32 0, %v55
  %v57 = vsel %vm51, %v56, %v55
  %vm58 = vcmp.ne.s32.totalorder %v36, 0
  %vm59 = vcmp.ne.s32.totalorder %v43, 0
  %vm60 = vcmp.ne.s32.totalorder %v50, 0
  %vm61 = vcmp.ne.s32.totalorder %v57, 0
  %vm62 = vcmp.lt.s32.totalorder %v36, 0
  %vm63 = vcmp.lt.s32.totalorder %v43, 0
  %vm64 = vcmp.lt.s32.totalorder %v50, 0
  %vm65 = vcmp.lt.s32.totalorder %v57, 0
  %vm66 = vmand %vm62, %vm58
  %vm67 = vmand %vm63, %vm59
  %vm68 = vmand %vm64, %vm60
  %vm69 = vmand %vm65, %vm61
  %v70 = vadd.s32 %v36, 16
  %v71 = vadd.s32 %v43, 16
  %v72 = vadd.s32 %v50, 16
  %v73 = vadd.s32 %v57, 16
  %v74 = vsel %vm66, %v70, %v36
  %v75 = vsel %vm67, %v71, %v43
  %v76 = vsel %vm68, %v72, %v50
  %v77 = vsel %vm69, %v73, %v57
  %vm78 = vcmp.ne.s32.totalorder %v74, 0
  %vm79 = vcmp.ne.s32.totalorder %v75, 0
  %vm80 = vcmp.ne.s32.totalorder %v76, 0
  %vm81 = vcmp.ne.s32.totalorder %v77, 0
  %vm82 = vcmp.ne.s32.totalorder %v74, 15
  %vm83 = vcmp.ne.s32.totalorder %v75, 15
  %vm84 = vcmp.ne.s32.totalorder %v76, 15
  %vm85 = vcmp.ne.s32.totalorder %v77, 15
  %v86 = vld [vmem:[%s2] sm:$0xff]
  %v87 = vld [vmem:[%s2 + $0x8] sm:$0xff]
  %v88 = vld [vmem:[%s2 + $0x10] sm:$0xff]
  %v89 = vld [vmem:[%s2 + $0x18] sm:$0xff]
  %v90 = vld [vmem:[%s2 + $0x20] sm:$0xff]
  %v91 = vld [vmem:[%s2 + $0x28] sm:$0xff]
  %v92 = vld [vmem:[%s2 + $0x30] sm:$0xff]
  %v93 = vld [vmem:[%s2 + $0x38] sm:$0xff]
  %v94 = vld [vmem:[%s1] sm:$0xf]
  %v95 = vld [vmem:[%s1 + $0x4] sm:$0xf]
  %v96 = vld [vmem:[%s1 + $0x8] sm:$0xf]
  %v97 = vld [vmem:[%s1 + $0xc] sm:$0xf]
  %v98 = vld [vmem:[%s1 + $0x10] sm:$0xf]
  %v99 = vld [vmem:[%s1 + $0x14] sm:$0xf]
  %v100 = vld [vmem:[%s1 + $0x18] sm:$0xf]
  %v101 = vld [vmem:[%s1 + $0x1c] sm:$0xf]
  %v106 = vunpack.c.l.b16 %v21
  %v107 = vunpack.c.l.b16 %v22
  %v108 = vunpack.c.l.b16 %v23
  %v109 = vunpack.c.l.b16 %v24
  %v110 = vpack.c.b16 %v107, %v106
  %v111 = vpack.c.b16 %v109, %v108
  %v120 = vunpack.c.l.b16 %v94
  %v121 = vunpack.c.l.b16 %v95
  %v122 = vunpack.c.l.b16 %v96
  %v123 = vunpack.c.l.b16 %v97
  %v124 = vunpack.c.l.b16 %v98
  %v125 = vunpack.c.l.b16 %v99
  %v126 = vunpack.c.l.b16 %v100
  %v127 = vunpack.c.l.b16 %v101
  %v128 = vpack.c.b16 %v121, %v120
  %v129 = vpack.c.b16 %v123, %v122
  %v130 = vpack.c.b16 %v125, %v124
  %v131 = vpack.c.b16 %v127, %v126
  %vm136 = vcmask 523264
  %v138 = vsel %vm136, %v110, 0
  %v141 = vsel %vm136, %v111, 0
  %143 = vmatprep.subr.bf16.mxu0 0
  %144 = vmatpush1.bf16.msra.mxu0 0
  %145 = vmatprep.subr.bf16.mxu0 0
  %146 = vmatpush1.bf16.msra.mxu0 0
  %147 = vmatprep.subr.bf16.mxu0 0
  %148 = vmatpush1.bf16.msra.mxu0 0
  %149 = vmatprep.subr.bf16.mxu0 0
  %150 = vmatpush1.bf16.msra.mxu0 0
  %151 = vmatprep.subr.bf16.mxu0 0
  %152 = vmatpush1.bf16.msra.mxu0 %v131
  %153 = vmatprep.subr.bf16.mxu0 0
  %154 = vmatpush1.bf16.msra.mxu0 %v130
  %155 = vmatprep.subr.bf16.mxu0 0
  %156 = vmatpush1.bf16.msra.mxu0 %v129
  %157 = vmatprep.subr.bf16.mxu0 0
  %158 = vmatpush1.bf16.msra.mxu0 %v128
  %159 = vmatprep.subr.bf16.mxu0 0
  %160 = vmatpush2.bf16.msra.mxu0 0
  %161 = vmatprep.subr.bf16.mxu0 0
  %162 = vmatpush2.bf16.msra.mxu0 0
  %163 = vmatprep.subr.bf16.mxu0 0
  %164 = vmatpush2.bf16.msra.mxu0 0
  %165 = vmatprep.subr.bf16.mxu0 0
  %166 = vmatpush2.bf16.msra.mxu0 0
  %167 = vmatprep.subr.bf16.mxu0 0
  %168 = vmatpush2.bf16.msra.mxu0 0
  %169 = vmatprep.subr.bf16.mxu0 0
  %170 = vmatpush2.bf16.msra.mxu0 0
  %171 = vmatprep.subr.bf16.mxu0 0
  %172 = vmatpush2.bf16.msra.mxu0 0
  %173 = vmatprep.subr.bf16.mxu0 0
  %174 = vmatpush2.bf16.msra.mxu0 0
  %175 = vmatprep.mubr.bf16.mxu0 0
  %176 = vmatmul.mubr.bf16.gmra.mxu0 %v138
  %v177 = vpop.f32.mrf.mxu0
  %v178 = vadd.f32 0.0, %v177
  %v179 = vpop.f32.mrf.mxu0
  %v180 = vpop.f32.mrf.mxu0
  %v181 = vadd.f32 0.0, %v180
  %v182 = vpop.f32.mrf.mxu0
  %183 = vmatprep.mubr.bf16.mxu0 0
  %184 = vmatmul.mubr.bf16.gmra.mxu0 %v141
  %v185 = vpop.f32.mrf.mxu0
  %v186 = vadd.f32 0.0, %v185
  %v187 = vpop.f32.mrf.mxu0
  %v188 = vpop.f32.mrf.mxu0
  %v189 = vadd.f32 0.0, %v188
  %v190 = vpop.f32.mrf.mxu0
  %191 = vdwg.mxu0
  %v192 = vld [vmem:[%s3] sm:$0xf]
  %v193 = vld [vmem:[%s3 + $0x4] sm:$0xf]
  %v194 = vld [vmem:[%s3 + $0x8] sm:$0xf]
  %v195 = vld [vmem:[%s3 + $0xc] sm:$0xf]
  %v196 = vld [vmem:[%s3 + $0x10] sm:$0xf]
  %v197 = vld [vmem:[%s3 + $0x14] sm:$0xf]
  %v198 = vld [vmem:[%s3 + $0x18] sm:$0xf]
  %v199 = vld [vmem:[%s3 + $0x1c] sm:$0xf]
  %v208 = vunpack.c.l.b16 %v192
  %v209 = vunpack.c.l.b16 %v193
  %v210 = vunpack.c.l.b16 %v194
  %v211 = vunpack.c.l.b16 %v195
  %v212 = vunpack.c.l.b16 %v196
  %v213 = vunpack.c.l.b16 %v197
  %v214 = vunpack.c.l.b16 %v198
  %v215 = vunpack.c.l.b16 %v199
  %v216 = vpack.c.b16 %v209, %v208
  %v217 = vpack.c.b16 %v211, %v210
  %v218 = vpack.c.b16 %v213, %v212
  %v219 = vpack.c.b16 %v215, %v214
  %224 = vmatprep.subr.bf16.mxu0 0
  %225 = vmatpush1.bf16.msra.mxu0 0
  %226 = vmatprep.subr.bf16.mxu0 0
  %227 = vmatpush1.bf16.msra.mxu0 0
  %228 = vmatprep.subr.bf16.mxu0 0
  %229 = vmatpush1.bf16.msra.mxu0 0
  %230 = vmatprep.subr.bf16.mxu0 0
  %231 = vmatpush1.bf16.msra.mxu0 0
  %232 = vmatprep.subr.bf16.mxu0 0
  %233 = vmatpush1.bf16.msra.mxu0 %v219
  %234 = vmatprep.subr.bf16.mxu0 0
  %235 = vmatpush1.bf16.msra.mxu0 %v218
  %236 = vmatprep.subr.bf16.mxu0 0
  %237 = vmatpush1.bf16.msra.mxu0 %v217
  %238 = vmatprep.subr.bf16.mxu0 0
  %239 = vmatpush1.bf16.msra.mxu0 %v216
  %240 = vmatprep.subr.bf16.mxu0 0
  %241 = vmatpush2.bf16.msra.mxu0 0
  %242 = vmatprep.subr.bf16.mxu0 0
  %243 = vmatpush2.bf16.msra.mxu0 0
  %244 = vmatprep.subr.bf16.mxu0 0
  %245 = vmatpush2.bf16.msra.mxu0 0
  %246 = vmatprep.subr.bf16.mxu0 0
  %247 = vmatpush2.bf16.msra.mxu0 0
  %248 = vmatprep.subr.bf16.mxu0 0
  %249 = vmatpush2.bf16.msra.mxu0 0
  %250 = vmatprep.subr.bf16.mxu0 0
  %251 = vmatpush2.bf16.msra.mxu0 0
  %252 = vmatprep.subr.bf16.mxu0 0
  %253 = vmatpush2.bf16.msra.mxu0 0
  %254 = vmatprep.subr.bf16.mxu0 0
  %255 = vmatpush2.bf16.msra.mxu0 0
  %256 = vmatprep.mubr.bf16.mxu0 0
  %257 = vmatmul.mubr.bf16.gmra.mxu0 %v138
  %v258 = vpop.f32.mrf.mxu0
  %v259 = vadd.f32 0.0, %v258
  %v260 = vpop.f32.mrf.mxu0
  %v261 = vpop.f32.mrf.mxu0
  %v262 = vadd.f32 0.0, %v261
  %v263 = vpop.f32.mrf.mxu0
  %264 = vmatprep.mubr.bf16.mxu0 0
  %265 = vmatmul.mubr.bf16.gmra.mxu0 %v141
  %v266 = vpop.f32.mrf.mxu0
  %v267 = vadd.f32 0.0, %v266
  %v268 = vpop.f32.mrf.mxu0
  %v269 = vpop.f32.mrf.mxu0
  %v270 = vadd.f32 0.0, %v269
  %v271 = vpop.f32.mrf.mxu0
  %272 = vdwg.mxu0
  %vm277 = vcmask 1040384
  %v278 = vrot.slane %v178, 7
  %v279 = vrot.slane %v181, 7
  %v280 = vsel %vm277, %v278, %v279
  %v281 = vrot.slane %v186, 7
  %v282 = vsel %vm277, %v279, %v281
  %v283 = vrot.slane %v189, 7
  %v284 = vsel %vm277, %v281, %v283
  %v289 = vsel %vm277, 0.0, %v278
  %vm294 = vcmask 1046528
  %v295 = vrot.slane %v259, 1
  %v296 = vrot.slane %v262, 1
  %v297 = vsel %vm294, %v295, %v296
  %v298 = vrot.slane %v267, 1
  %v299 = vsel %vm294, %v296, %v298
  %v300 = vrot.slane %v270, 1
  %v301 = vsel %vm294, %v298, %v300
  %v306 = vsel %vm294, %v300, 0.0
  %v307 = vsel %vm78, 1, 0
  %v308 = vsel %vm79, 1, 0
  %v309 = vsel %vm80, 1, 0
  %v310 = vsel %vm81, 1, 0
  %vm311 = vcmp.eq.s32.totalorder %v307, 1
  %vm312 = vcmp.eq.s32.totalorder %v308, 1
  %vm313 = vcmp.eq.s32.totalorder %v309, 1
  %vm314 = vcmp.eq.s32.totalorder %v310, 1
  %v315 = vsel %vm311, %v289, 0.0
  %v316 = vsel %vm312, %v280, 0.0
  %v317 = vsel %vm313, %v282, 0.0
  %v318 = vsel %vm314, %v284, 0.0
  %v319 = vsel %vm82, 1, 0
  %v320 = vsel %vm83, 1, 0
  %v321 = vsel %vm84, 1, 0
  %v322 = vsel %vm85, 1, 0
  %vm323 = vcmp.eq.s32.totalorder %v319, 1
  %vm324 = vcmp.eq.s32.totalorder %v320, 1
  %vm325 = vcmp.eq.s32.totalorder %v321, 1
  %vm326 = vcmp.eq.s32.totalorder %v322, 1
  %v327 = vsel %vm323, %v297, 0.0
  %v328 = vsel %vm324, %v299, 0.0
  %v329 = vsel %vm325, %v301, 0.0
  %v330 = vsel %vm326, %v306, 0.0
  %v331 = vld [vmem:[%s4] sm:$0x3]
  %v333 = vlaneseq
  %v334 = vshrl.u32 %v333, 7
  %v335 = vsub.s32 0, %v334
  %v336 = vrot.slane %v331, %v335
  %v337 = vlaneseq
  %v338 = vshrl.u32 %v337, 7
  %v339 = vsub.s32 1, %v338
  %v340 = vrot.slane %v331, %v339
  %v351 = vunpack.c.l.b16 %v86
  %v352 = vunpack.c.h.b16 %v86
  %v353 = vunpack.c.l.b16 %v87
  %v354 = vunpack.c.h.b16 %v87
  %v355 = vunpack.c.l.b16 %v88
  %v356 = vunpack.c.h.b16 %v88
  %v357 = vunpack.c.l.b16 %v89
  %v358 = vunpack.c.h.b16 %v89
  %v359 = vunpack.c.l.b16 %v90
  %v360 = vunpack.c.h.b16 %v90
  %v361 = vunpack.c.l.b16 %v91
  %v362 = vunpack.c.h.b16 %v91
  %v363 = vunpack.c.l.b16 %v92
  %v364 = vunpack.c.h.b16 %v92
  %v365 = vunpack.c.l.b16 %v93
  %v366 = vunpack.c.h.b16 %v93
  %v367 = vpack.c.b16 %v353, %v351
  %v368 = vpack.c.b16 %v354, %v352
  %v369 = vpack.c.b16 %v357, %v355
  %v370 = vpack.c.b16 %v358, %v356
  %v371 = vpack.c.b16 %v361, %v359
  %v372 = vpack.c.b16 %v362, %v360
  %v373 = vpack.c.b16 %v365, %v363
  %v374 = vpack.c.b16 %v366, %v364
  %383 = vmatprep.subr.bf16.mxu0 0
  %384 = vmatpush1.bf16.msra.mxu0 0
  %385 = vmatprep.subr.bf16.mxu0 0
  %386 = vmatpush1.bf16.msra.mxu0 0
  %387 = vmatprep.subr.bf16.mxu0 0
  %388 = vmatpush1.bf16.msra.mxu0 0
  %389 = vmatprep.subr.bf16.mxu0 0
  %390 = vmatpush1.bf16.msra.mxu0 0
  %391 = vmatprep.subr.bf16.mxu0 %v374
  %392 = vmatpush1.bf16.msra.mxu0 %v373
  %393 = vmatprep.subr.bf16.mxu0 %v372
  %394 = vmatpush1.bf16.msra.mxu0 %v371
  %395 = vmatprep.subr.bf16.mxu0 %v370
  %396 = vmatpush1.bf16.msra.mxu0 %v369
  %397 = vmatprep.subr.bf16.mxu0 %v368
  %398 = vmatpush1.bf16.msra.mxu0 %v367
  %399 = vmatprep.subr.bf16.mxu0 0
  %400 = vmatpush2.bf16.msra.mxu0 0
  %401 = vmatprep.subr.bf16.mxu0 0
  %402 = vmatpush2.bf16.msra.mxu0 0
  %403 = vmatprep.subr.bf16.mxu0 0
  %404 = vmatpush2.bf16.msra.mxu0 0
  %405 = vmatprep.subr.bf16.mxu0 0
  %406 = vmatpush2.bf16.msra.mxu0 0
  %407 = vmatprep.subr.bf16.mxu0 0
  %408 = vmatpush2.bf16.msra.mxu0 0
  %409 = vmatprep.subr.bf16.mxu0 0
  %410 = vmatpush2.bf16.msra.mxu0 0
  %411 = vmatprep.subr.bf16.mxu0 0
  %412 = vmatpush2.bf16.msra.mxu0 0
  %413 = vmatprep.subr.bf16.mxu0 0
  %414 = vmatpush2.bf16.msra.mxu0 0
  %415 = vmatprep.mubr.bf16.mxu0 0
  %416 = vmatmul.mubr.bf16.gmra.mxu0 %v138
  %v417 = vpop.f32.mrf.mxu0
  %v418 = vadd.f32 %v336, %v417
  %v419 = vpop.f32.mrf.mxu0
  %v420 = vadd.f32 %v340, %v419
  %v421 = vpop.f32.mrf.mxu0
  %v422 = vadd.f32 %v336, %v421
  %v423 = vpop.f32.mrf.mxu0
  %v424 = vadd.f32 %v340, %v423
  %425 = vmatprep.mubr.bf16.mxu0 0
  %426 = vmatmul.mubr.bf16.gmra.mxu0 %v141
  %v427 = vpop.f32.mrf.mxu0
  %v428 = vadd.f32 %v336, %v427
  %v429 = vpop.f32.mrf.mxu0
  %v430 = vadd.f32 %v340, %v429
  %v431 = vpop.f32.mrf.mxu0
  %v432 = vadd.f32 %v336, %v431
  %v433 = vpop.f32.mrf.mxu0
  %v434 = vadd.f32 %v340, %v433
  %435 = vdwg.mxu0
  %v436 = vadd.f32 %v418, %v315
  %v437 = vadd.f32 %v422, %v316
  %v438 = vadd.f32 %v428, %v317
  %v439 = vadd.f32 %v432, %v318
  %v440 = vadd.f32 %v436, %v327
  %v441 = vadd.f32 %v437, %v328
  %v442 = vadd.f32 %v438, %v329
  %v443 = vadd.f32 %v439, %v330
  %vm444 = vcmp.ge.f32.partialorder %v440, 0.0
  %vm445 = vcmp.ge.f32.partialorder %v441, 0.0
  %vm446 = vcmp.ge.f32.partialorder %v442, 0.0
  %vm447 = vcmp.ge.f32.partialorder %v443, 0.0
  %v448 = vmul.f32 %v440, 0.2
  %v449 = vmul.f32 %v441, 0.2
  %v450 = vmul.f32 %v442, 0.2
  %v451 = vmul.f32 %v443, 0.2
  %v452 = vsel %vm444, %v440, %v448
  %v453 = vsel %vm445, %v441, %v449
  %v454 = vsel %vm446, %v442, %v450
  %v455 = vsel %vm447, %v443, %v451
  %v456 = vadd.f32 %v452, %v420
  %v457 = vadd.f32 %v453, %v424
  %v458 = vadd.f32 %v454, %v430
  %v459 = vadd.f32 %v455, %v434
  %v460 = vpack.c.bf16 %v457, %v456
  %v461 = vpack.c.bf16 %v459, %v458
  %v464 = vunpack.c.l.b16 %v460
  %v465 = vunpack.c.h.b16 %v460
  %v466 = vunpack.c.l.b16 %v461
  %v467 = vunpack.c.h.b16 %v461
  %v468 = vpack.c.b16 %v464, %v464
  %v469 = vpack.c.b16 %v465, %v465
  %v470 = vpack.c.b16 %v466, %v466
  %v471 = vpack.c.b16 %v467, %v467
  %476 = vst [vmem:[%s5] sm:$0xf] %v468
  %477 = vst [vmem:[%s5 + $0x4] sm:$0xf] %v469
  %478 = vst [vmem:[%s5 + $0x8] sm:$0xf] %v470
  %479 = vst [vmem:[%s5 + $0xc] sm:$0xf] %v471
  // Predicated region
  $region22: #{residual_block_forward.1} parent=0 // pred_check
    _
  $region23: #{residual_block_forward.1} parent=0 // pred_check_branch
    %481 = sbr.rel (0) target = $region25
  $region24: #{residual_block_forward.1} parent=0 // pred_region
    _
  $region25: #{residual_block_forward.1} parent=0 // pred_fallthru
    _
  // Predicated region
  $region26: #{residual_block_forward.1} parent=0 // pred_check
    _
  $region27: #{residual_block_forward.1} parent=0 // pred_check_branch
    %483 = sbr.rel (0) target = $region29
  $region28: #{residual_block_forward.1} parent=0 // pred_region
    _
  $region29: #{residual_block_forward.1} parent=0 // pred_fallthru
    _

</llo_original>
